<compile_context>
chip_gen: v7x
topology: tpu7x:2x2x1
jax: 0.10.0
libtpu: 0.0.40
codegen_flags: <defaults>
</compile_context>

<pallas_src>
import functools

import jax
import jax.numpy as jnp
from jax.experimental import pallas as pl
from jax.experimental.pallas import tpu as pltpu

BN_EPS = 1e-5
_VMEM_LIMIT_BYTES = 32 * 1024 * 1024    # explicit scoped-VMEM limit (safe on v5e/v6e/v7x)
_TILE_VMEM_BUDGET = 8 * 1024 * 1024     # per-grid-step double-buffered working-set budget


def _deconv_tile(w, x):
    """(Cout*4, Cin)[bf16] contracted with (Cin, t)[bf16] -> (Cout*4, t)[f32]."""
    cin = w.shape[1]
    if cin <= 8:
        # Cin far below the MXU contraction width -> VPU broadcast-MAC in f32.
        wf = w.astype(jnp.float32)
        xf = x.astype(jnp.float32)
        acc = wf[:, 0:1] * xf[0:1, :]
        for c in range(1, cin):
            acc = acc + wf[:, c:c + 1] * xf[c:c + 1, :]
        return acc
    # Larger Cin: use the MXU (bf16 inputs, f32 accumulation).
    return jnp.dot(w, x, preferred_element_type=jnp.float32)


def _stats_kernel(x_ref, w_ref, sum_ref, ssq_ref, *, hw, t_hw):
    """Pass 1: recompute the deconv tile, accumulate per-row sum / sumsq (BN statistics)."""
    @pl.when(jnp.logical_and(pl.program_id(0) == 0, pl.program_id(1) == 0))
    def _init():
        sum_ref[...] = jnp.zeros_like(sum_ref)
        ssq_ref[...] = jnp.zeros_like(ssq_ref)

    y = _deconv_tile(w_ref[...], x_ref[0])                         # (Cout*4, t) f32
    if hw % t_hw != 0:                                             # ragged last tile: mask garbage lanes
        col = jax.lax.broadcasted_iota(jnp.int32, y.shape, 1) + pl.program_id(1) * t_hw
        y = jnp.where(col < hw, y, 0.0)
    sum_ref[...] += jnp.sum(y, axis=-1, keepdims=True)
    ssq_ref[...] += jnp.sum(y * y, axis=-1, keepdims=True)


def _apply_kernel(x_ref, w_ref, scale_ref, shift_ref, o_ref):
    """Pass 2: recompute the deconv tile, apply folded BN scale/shift + ReLU, write once."""
    y = _deconv_tile(w_ref[...], x_ref[0])                         # (Cout*4, t) f32
    o_ref[0] = jnp.maximum(y * scale_ref[...] + shift_ref[...], 0.0)


def _choose_hw_tile(hw, cin, cg4, budget_bytes=_TILE_VMEM_BUDGET):
    """Largest 128-lane-multiple spatial tile whose double-buffered working set fits budget."""
    if hw <= 128:
        return hw
    nblocks = min(pl.cdiv(hw, 128), 16)                            # cap tile at 2048 lanes
    while nblocks > 1 and 2 * (nblocks * 128) * (2 * cin + 4 * cg4) > budget_bytes:
        nblocks //= 2
    return nblocks * 128


def trans_basic_conv2d(x_nchw, weight, gamma, beta, *, eps=BN_EPS):
    """x_nchw: (N, Cin, H, W); weight: (Cin, Cout, 2, 2) [PyTorch ConvTranspose2d layout];
    gamma/beta: (Cout,).  Returns (N, Cout, 2H, 2W) float32 (NCHW)."""
    n, cin, h, w = x_nchw.shape
    cin_w, cout, kh, kw = weight.shape
    assert cin == cin_w and kh == 2 and kw == 2
    hw = h * w
    cg4 = cout * 4

    # bf16 operands (halve matmul-input HBM traffic), f32 accumulation inside the kernels.
    x3 = x_nchw.reshape(n, cin, hw).astype(jnp.bfloat16)                       # free reshape + cast
    w2 = weight.transpose(1, 2, 3, 0).reshape(cg4, cin).astype(jnp.bfloat16)   # row = o*4 + a*2 + b

    t_hw = _choose_hw_tile(hw, cin, cg4)
    n_t = pl.cdiv(hw, t_hw)

    # ---- pass 1: per-row sum / sumsq accumulated in resident output blocks -------------
    row_sum, row_ssq = pl.pallas_call(
        functools.partial(_stats_kernel, hw=hw, t_hw=t_hw),
        out_shape=(jax.ShapeDtypeStruct((cg4, 1), jnp.float32),
                   jax.ShapeDtypeStruct((cg4, 1), jnp.float32)),
        grid_spec=pltpu.PrefetchScalarGridSpec(
            num_scalar_prefetch=0,
            grid=(n, n_t),
            in_specs=[
                pl.BlockSpec((1, cin, t_hw), lambda i, t: (i, 0, t)),
                pl.BlockSpec((cg4, cin), lambda i, t: (0, 0)),
            ],
            out_specs=(
                pl.BlockSpec((cg4, 1), lambda i, t: (0, 0)),
                pl.BlockSpec((cg4, 1), lambda i, t: (0, 0)),
            ),
        ),
        compiler_params=pltpu.CompilerParams(
            dimension_semantics=("arbitrary", "arbitrary"),   # global reduction across grid
            vmem_limit_bytes=_VMEM_LIMIT_BYTES,
        ),
    )(x3, w2)

    # ---- fold BatchNorm (training-mode biased variance) into per-row scale/shift --------
    count = jnp.float32(n * hw * 4)                  # = N * Hout * Wout elements per channel
    ch_sum = row_sum.reshape(cout, 4).sum(axis=1)
    ch_ssq = row_ssq.reshape(cout, 4).sum(axis=1)
    mean = ch_sum / count
    # TODO(synk): E[y^2]-E[y]^2 in f32 is fine at these sizes; for very large N*H*W use a
    # shifted / Welford-style cross-tile combine instead.
    var = jnp.maximum(ch_ssq / count - mean * mean, 0.0)
    inv_std = jax.lax.rsqrt(var + eps)
    scale_c = gamma.astype(jnp.float32) * inv_std
    shift_c = beta.astype(jnp.float32) - mean * scale_c
    scale = jnp.repeat(scale_c, 4).reshape(cg4, 1)
    shift = jnp.repeat(shift_c, 4).reshape(cg4, 1)

    # ---- pass 2: recompute deconv tile, normalize + ReLU, single lane-dense write -------
    y = pl.pallas_call(
        _apply_kernel,
        out_shape=jax.ShapeDtypeStruct((n, cg4, hw), jnp.float32),
        grid_spec=pltpu.PrefetchScalarGridSpec(
            num_scalar_prefetch=0,
            grid=(n, n_t),
            in_specs=[
                pl.BlockSpec((1, cin, t_hw), lambda i, t: (i, 0, t)),
                pl.BlockSpec((cg4, cin), lambda i, t: (0, 0)),
                pl.BlockSpec((cg4, 1), lambda i, t: (0, 0)),
                pl.BlockSpec((cg4, 1), lambda i, t: (0, 0)),
            ],
            out_specs=pl.BlockSpec((1, cg4, t_hw), lambda i, t: (i, 0, t)),
        ),
        compiler_params=pltpu.CompilerParams(
            dimension_semantics=("parallel", "parallel"),     # shards across v7x's 2 TCs
            vmem_limit_bytes=_VMEM_LIMIT_BYTES,
        ),
    )(x3, w2, scale, shift)

    # ---- single scatter to NCHW at the very end (the only full-tensor layout pass) ------
    out = (y.reshape(n, cout, 2, 2, h, w)
            .transpose(0, 1, 4, 2, 5, 3)
            .reshape(n, cout, 2 * h, 2 * w))
    return out


# -----------------------------------------------------------------------------------------
# Pure-JAX reference with the same bf16-operand / f32-accumulate contract as the kernels.
# -----------------------------------------------------------------------------------------
def reference(x_nchw, weight, gamma, beta, *, eps=BN_EPS):
    n, cin, h, w = x_nchw.shape
    _, cout, _, _ = weight.shape
    xr = x_nchw.astype(jnp.bfloat16).astype(jnp.float32)
    wr = weight.astype(jnp.bfloat16).astype(jnp.float32)
    y = jnp.einsum("ncij,cdab->ndiajb", xr, wr,
                   precision="highest").reshape(n, cout, 2 * h, 2 * w)
    mean = jnp.mean(y, axis=(0, 2, 3), keepdims=True)
    var = jnp.mean((y - mean) ** 2, axis=(0, 2, 3), keepdims=True)
    y = (y - mean) * jax.lax.rsqrt(var + eps)
    y = y * gamma[None, :, None, None] + beta[None, :, None, None]
    return jnp.maximum(y, 0.0)


if __name__ == "__main__":
    key = jax.random.PRNGKey(0)
    kx, kwt = jax.random.split(key)

    n, cin, h, w = 2, 4, 16, 16
    cout = 8

    x = jax.random.normal(kx, (n, cin, h, w), dtype=jnp.float32)
    weight = jax.random.normal(kwt, (cin, cout, 2, 2), dtype=jnp.float32) * 0.1
    gamma = jnp.ones((cout,), dtype=jnp.float32)    # BatchNorm2d default affine init
    beta = jnp.zeros((cout,), dtype=jnp.float32)

    out = trans_basic_conv2d(x, weight, gamma, beta)
    out = jax.block_until_ready(out)

    ref = reference(x, weight, gamma, beta)
    assert out.shape == (n, cout, 2 * h, 2 * w)
    # bf16 operand rounding is mirrored in the reference, so the check stays tight.
    assert jnp.allclose(out, ref, atol=1e-3, rtol=1e-3), "mismatch vs reference"

    print("KERNEL_OK")
</pallas_src>

<mosaic_0001>
module attributes {stable_mosaic.version = 11 : i64} {
  func.func @_stats_kernel(%arg0: i32, %arg1: i32, %arg2: memref<1x4x256xbf16, #tpu.memory_space<vmem>>, %arg3: memref<32x4xbf16, #tpu.memory_space<vmem>>, %arg4: memref<32x1xf32, #tpu.memory_space<vmem>>, %arg5: memref<32x1xf32, #tpu.memory_space<vmem>>) attributes {dimension_semantics = [#tpu.dimension_semantics<arbitrary>, #tpu.dimension_semantics<arbitrary>], iteration_bounds = array<i64: 2, 1>, scalar_prefetch = 0 : i64, scratch_operands = 0 : i64, tpu.core_type = #tpu.core_type<tc>, window_params = [{transform_indices = @transform_0, window_bounds = array<i64: 1, 4, 256>}, {pipeline_mode = #tpu.pipeline_mode<synchronous>, transform_indices = @transform_1, window_bounds = array<i64: 32, 4>}, {pipeline_mode = #tpu.pipeline_mode<synchronous>, transform_indices = @transform_2, window_bounds = array<i64: 32, 1>}, {pipeline_mode = #tpu.pipeline_mode<synchronous>, transform_indices = @transform_3, window_bounds = array<i64: 32, 1>}]} {
    %c0_i32 = arith.constant 0 : i32
    %0 = arith.cmpi eq, %arg0, %c0_i32 : i32
    %c0_i32_0 = arith.constant 0 : i32
    %1 = arith.cmpi eq, %arg1, %c0_i32_0 : i32
    %2 = arith.andi %0, %1 : i1
    %3 = arith.extui %2 : i1 to i32
    %c0_i32_1 = arith.constant 0 : i32
    %4 = arith.cmpi ne, %3, %c0_i32_1 : i32
    scf.if %4 {
      %cst_15 = arith.constant 0.000000e+00 : f32
      %44 = vector.broadcast %cst_15 : f32 to vector<32x1xf32>
      %c0_16 = arith.constant 0 : index
      %c0_17 = arith.constant 0 : index
      %45 = vector.load %arg4[%c0_16, %c0_17] : memref<32x1xf32, #tpu.memory_space<vmem>>, vector<32x1xf32>
      tpu.vector_store %arg4[%c0_16, %c0_17], %44 {strides = array<i32>} : memref<32x1xf32, #tpu.memory_space<vmem>>, vector<32x1xf32>,
      %cst_18 = arith.constant 0.000000e+00 : f32
      %46 = vector.broadcast %cst_18 : f32 to vector<32x1xf32>
      %c0_19 = arith.constant 0 : index
      %c0_20 = arith.constant 0 : index
      %47 = vector.load %arg5[%c0_19, %c0_20] : memref<32x1xf32, #tpu.memory_space<vmem>>, vector<32x1xf32>
      tpu.vector_store %arg5[%c0_19, %c0_20], %46 {strides = array<i32>} : memref<32x1xf32, #tpu.memory_space<vmem>>, vector<32x1xf32>,
    } else {
    }
    %c0 = arith.constant 0 : index
    %c0_2 = arith.constant 0 : index
    %5 = vector.load %arg3[%c0, %c0_2] : memref<32x4xbf16, #tpu.memory_space<vmem>>, vector<32x4xbf16>
    %c0_3 = arith.constant 0 : index
    %c0_4 = arith.constant 0 : index
    %c0_5 = arith.constant 0 : index
    %6 = vector.load %arg2[%c0_3, %c0_4, %c0_5] : memref<1x4x256xbf16, #tpu.memory_space<vmem>>, vector<1x4x256xbf16>
    %7 = vector.shape_cast %6 : vector<1x4x256xbf16> to vector<4x256xbf16>
    %8 = arith.extf %5 : vector<32x4xbf16> to vector<32x4xf32>
    %9 = arith.extf %7 : vector<4x256xbf16> to vector<4x256xf32>
    %10 = vector.extract_strided_slice %8 {offsets = [0, 0], sizes = [32, 1], strides = [1, 1]} : vector<32x4xf32> to vector<32x1xf32>
    %11 = vector.extract_strided_slice %9 {offsets = [0, 0], sizes = [1, 256], strides = [1, 1]} : vector<4x256xf32> to vector<1x256xf32>
    %12 = vector.broadcast %10 : vector<32x1xf32> to vector<32x256xf32>
    %13 = vector.broadcast %11 : vector<1x256xf32> to vector<32x256xf32>
    %14 = arith.mulf %12, %13 : vector<32x256xf32>
    %15 = vector.extract_strided_slice %8 {offsets = [0, 1], sizes = [32, 1], strides = [1, 1]} : vector<32x4xf32> to vector<32x1xf32>
    %16 = vector.extract_strided_slice %9 {offsets = [1, 0], sizes = [1, 256], strides = [1, 1]} : vector<4x256xf32> to vector<1x256xf32>
    %17 = vector.broadcast %15 : vector<32x1xf32> to vector<32x256xf32>
    %18 = vector.broadcast %16 : vector<1x256xf32> to vector<32x256xf32>
    %19 = arith.mulf %17, %18 : vector<32x256xf32>
    %20 = arith.addf %14, %19 : vector<32x256xf32>
    %21 = vector.extract_strided_slice %8 {offsets = [0, 2], sizes = [32, 1], strides = [1, 1]} : vector<32x4xf32> to vector<32x1xf32>
    %22 = vector.extract_strided_slice %9 {offsets = [2, 0], sizes = [1, 256], strides = [1, 1]} : vector<4x256xf32> to vector<1x256xf32>
    %23 = vector.broadcast %21 : vector<32x1xf32> to vector<32x256xf32>
    %24 = vector.broadcast %22 : vector<1x256xf32> to vector<32x256xf32>
    %25 = arith.mulf %23, %24 : vector<32x256xf32>
    %26 = arith.addf %20, %25 : vector<32x256xf32>
    %27 = vector.extract_strided_slice %8 {offsets = [0, 3], sizes = [32, 1], strides = [1, 1]} : vector<32x4xf32> to vector<32x1xf32>
    %28 = vector.extract_strided_slice %9 {offsets = [3, 0], sizes = [1, 256], strides = [1, 1]} : vector<4x256xf32> to vector<1x256xf32>
    %29 = vector.broadcast %27 : vector<32x1xf32> to vector<32x256xf32>
    %30 = vector.broadcast %28 : vector<1x256xf32> to vector<32x256xf32>
    %31 = arith.mulf %29, %30 : vector<32x256xf32>
    %32 = arith.addf %26, %31 : vector<32x256xf32>
    %c0_6 = arith.constant 0 : index
    %c0_7 = arith.constant 0 : index
    %33 = vector.load %arg4[%c0_6, %c0_7] : memref<32x1xf32, #tpu.memory_space<vmem>>, vector<32x1xf32>
    %cst = arith.constant dense<0.000000e+00> : vector<32xf32>
    %34 = vector.multi_reduction <add>, %32, %cst [1] : vector<32x256xf32> to vector<32xf32>
    %35 = vector.shape_cast %34 : vector<32xf32> to vector<32x1xf32>
    %36 = arith.addf %33, %35 : vector<32x1xf32>
    %c0_8 = arith.constant 0 : index
    %c0_9 = arith.constant 0 : index
    %37 = vector.load %arg4[%c0_8, %c0_9] : memref<32x1xf32, #tpu.memory_space<vmem>>, vector<32x1xf32>
    tpu.vector_store %arg4[%c0_8, %c0_9], %36 {strides = array<i32>} : memref<32x1xf32, #tpu.memory_space<vmem>>, vector<32x1xf32>,
    %c0_10 = arith.constant 0 : index
    %c0_11 = arith.constant 0 : index
    %38 = vector.load %arg5[%c0_10, %c0_11] : memref<32x1xf32, #tpu.memory_space<vmem>>, vector<32x1xf32>
    %39 = arith.mulf %32, %32 : vector<32x256xf32>
    %cst_12 = arith.constant dense<0.000000e+00> : vector<32xf32>
    %40 = vector.multi_reduction <add>, %39, %cst_12 [1] : vector<32x256xf32> to vector<32xf32>
    %41 = vector.shape_cast %40 : vector<32xf32> to vector<32x1xf32>
    %42 = arith.addf %38, %41 : vector<32x1xf32>
    %c0_13 = arith.constant 0 : index
    %c0_14 = arith.constant 0 : index
    %43 = vector.load %arg5[%c0_13, %c0_14] : memref<32x1xf32, #tpu.memory_space<vmem>>, vector<32x1xf32>
    tpu.vector_store %arg5[%c0_13, %c0_14], %42 {strides = array<i32>} : memref<32x1xf32, #tpu.memory_space<vmem>>, vector<32x1xf32>,
    return
  }
  func.func @transform_0(%arg0: i32, %arg1: i32) -> (i32, i32, i32) {
    %c0_i32 = arith.constant 0 : i32
    %c0_i32_0 = arith.constant 0 : i32
    return %arg0, %c0_i32, %arg1 : i32, i32, i32
  }
  func.func @transform_1(%arg0: i32, %arg1: i32) -> (i32, i32) {
    %c0_i32 = arith.constant 0 : i32
    %c0_i32_0 = arith.constant 0 : i32
    %c0_i32_1 = arith.constant 0 : i32
    return %c0_i32, %c0_i32_0 : i32, i32
  }
  func.func @transform_2(%arg0: i32, %arg1: i32) -> (i32, i32) {
    %c0_i32 = arith.constant 0 : i32
    %c0_i32_0 = arith.constant 0 : i32
    %c0_i32_1 = arith.constant 0 : i32
    return %c0_i32, %c0_i32_0 : i32, i32
  }
  func.func @transform_3(%arg0: i32, %arg1: i32) -> (i32, i32) {
    %c0_i32 = arith.constant 0 : i32
    %c0_i32_0 = arith.constant 0 : i32
    %c0_i32_1 = arith.constant 0 : i32
    return %c0_i32, %c0_i32_0 : i32, i32
  }
}

</mosaic_0001>

<llo_original>
// kernel: tpu_custom_call.1
$region0: #{tpu_custom_call.1}
  #allocation0 [shape = 'u32[]', space=smem, size = 0x4, offset = 0x4, fixed_abs, tag = 'smem constant byte address 0x4 - core index']
  #allocation1 [shape = 'u32[144,128]{1,0:T(1,128)}', space=vmem, size = 0x12000, scoped, tag = 'internal scratch']
  %s0 = inlined_call_operand.vmem [shape: bf16[2,4,256], index: 0, kind: input, shape index: {}]
  %s1 = inlined_call_operand.vmem [shape: bf16[32,4], index: 1, kind: input, shape index: {}]
  %s2 = inlined_call_operand.vmem [shape: f32[32,1], index: 2, kind: output, shape index: {0}]
  %s3 = inlined_call_operand.vmem [shape: f32[32,1], index: 3, kind: output, shape index: {1}]
  %4 = xla_tuple %s2, %s3
  %s5 = sld [smem:[#allocation0]]
  $region53: #{tpu_custom_call.1} parent=0
    _
  %s7 = ssub.s32 1, %s5
  %s8 = scalar_select 0, %s7, %s5
  loop: start=0, step=1, limit=4
  $region2: #{tpu_custom_call.1} parent=0 // loop_pre_header
    _
  $region3: #{tpu_custom_call.1} parent=0 // loop_header
    %s10 = sphi 0, %s14
    %p11 = scmp.ge.s32.totalorder %s10, 4
    %s17 = sphi 0, %s29
    %s18 = sphi 0, %s25
    %s19 = sphi 0, %s17
    %s20 = sphi 0, %s18
    %s21 = sphi 0, %s19
    %s22 = sphi 0, %s20
    %s34 = sphi 0, %s36
    %s37 = sphi 0, %s34
    %s38 = sphi 0, %s37
    %s54 = sphi 0, %s38
    %s58 = sphi 0, %s58
    %s60 = sphi 0, %s58
    %s61 = sphi 0, %s60
    %s75 = sphi 0, %s61
    %s79 = sphi 0, %s79
    %s81 = sphi 0, %s79
    %s82 = sphi 0, %s81
    %s96 = sphi 0, %s82
    %s100 = sphi 0, %s100
    %s102 = sphi 0, %s100
    %s103 = sphi 0, %s102
    %s117 = sphi 0, %s103
  $region4: #{tpu_custom_call.1} parent=0 // loop_header_branch
    %13 = sbr.rel (%p11) target = $region8
  $region5: #{tpu_custom_call.1} parent=0 // loop_body
    %s15 = ssub.s32 %s10, 1
    %s16 = ssub.s32 %s10, 2
    %s23 = sadd.s32 1, %s18
    %p24 = scmp.ge.s32.totalorder %s23, 1
    %s25 = scalar_select %p24, 0, %s23
    %s26 = sadd.s32 1, %s17
    %s27 = scalar_select %p24, %s26, %s17
    %p28 = scmp.ge.s32.totalorder %s27, 2
    %s29 = scalar_select %p28, 0, %s27
    %s30 = ssub.s32 %s17, %s29
    %s31 = ssub.s32 %s18, %s25
    %s32 = sor.u32 %s30, %s31
    %p33 = scmp.eq.s32.totalorder %s32, 0
    %s35 = sadd.s32 %s34, 1
    %s36 = scalar_select %p33, %s34, %s35
    %p39 = pneg %p33
    %p40 = scmp.eq.s32.totalorder %s10, 1
    %p41 = por %p39, %p40
    %p42 = scmp.ne.s32.totalorder %s34, %s37
    %p43 = scmp.eq.s32.totalorder %s10, 0
    %p44 = por %p42, %p43
    %p45 = scmp.ne.s32.totalorder %s34, %s37
    %p46 = scmp.eq.s32.totalorder %s15, 1
    %p47 = por %p45, %p46
    %p48 = scmp.ne.s32.totalorder %s37, %s38
    %p49 = scmp.eq.s32.totalorder %s15, 0
    %p50 = por %p48, %p49
    %p51 = scmp.ne.s32.totalorder %s37, %s38
    %p52 = scmp.eq.s32.totalorder %s16, 1
    %p53 = por %p51, %p52
    %p55 = scmp.ne.s32.totalorder %s38, %s54
    %p56 = scmp.eq.s32.totalorder %s16, 0
    %p57 = por %p55, %p56
    %s59 = sadd.s32 %s58, 1
    %p62 = scmp.eq.s32.totalorder %s10, 1
    %p63 = scmp.ne.s32.totalorder %s58, %s60
    %p64 = scmp.eq.s32.totalorder %s10, 0
    %p65 = por %p63, %p64
    %p66 = scmp.ne.s32.totalorder %s58, %s60
    %p67 = scmp.eq.s32.totalorder %s15, 1
    %p68 = por %p66, %p67
    %p69 = scmp.ne.s32.totalorder %s60, %s61
    %p70 = scmp.eq.s32.totalorder %s15, 0
    %p71 = por %p69, %p70
    %p72 = scmp.ne.s32.totalorder %s60, %s61
    %p73 = scmp.eq.s32.totalorder %s16, 1
    %p74 = por %p72, %p73
    %p76 = scmp.ne.s32.totalorder %s61, %s75
    %p77 = scmp.eq.s32.totalorder %s16, 0
    %p78 = por %p76, %p77
    %s80 = sadd.s32 %s79, 1
    %p83 = scmp.eq.s32.totalorder %s10, 1
    %p84 = scmp.ne.s32.totalorder %s79, %s81
    %p85 = scmp.eq.s32.totalorder %s10, 0
    %p86 = por %p84, %p85
    %p87 = scmp.ne.s32.totalorder %s79, %s81
    %p88 = scmp.eq.s32.totalorder %s15, 1
    %p89 = por %p87, %p88
    %p90 = scmp.ne.s32.totalorder %s81, %s82
    %p91 = scmp.eq.s32.totalorder %s15, 0
    %p92 = por %p90, %p91
    %p93 = scmp.ne.s32.totalorder %s81, %s82
    %p94 = scmp.eq.s32.totalorder %s16, 1
    %p95 = por %p93, %p94
    %p97 = scmp.ne.s32.totalorder %s82, %s96
    %p98 = scmp.eq.s32.totalorder %s16, 0
    %p99 = por %p97, %p98
    %s101 = sadd.s32 %s100, 1
    %p104 = scmp.eq.s32.totalorder %s10, 1
    %p105 = scmp.ne.s32.totalorder %s100, %s102
    %p106 = scmp.eq.s32.totalorder %s10, 0
    %p107 = por %p105, %p106
    %p108 = scmp.ne.s32.totalorder %s100, %s102
    %p109 = scmp.eq.s32.totalorder %s15, 1
    %p110 = por %p108, %p109
    %p111 = scmp.ne.s32.totalorder %s102, %s103
    %p112 = scmp.eq.s32.totalorder %s15, 0
    %p113 = por %p111, %p112
    %p114 = scmp.ne.s32.totalorder %s102, %s103
    %p115 = scmp.eq.s32.totalorder %s16, 1
    %p116 = por %p114, %p115
    %p118 = scmp.ne.s32.totalorder %s103, %s117
    %p119 = scmp.eq.s32.totalorder %s16, 0
    %p120 = por %p118, %p119
    %p121 = scmp.le.s32.totalorder 1, %s10
    %p122 = scmp.lt.s32.totalorder %s10, 3
    %p123 = pnand %p121, %p122
    %p124 = pneg %p123
    // Predicated region
    $region9: #{tpu_custom_call.1} parent=5 // pred_check
      _
    $region10: #{tpu_custom_call.1} parent=5 // pred_check_branch
      %126 = sbr.rel (%p123) target = $region12
    $region11: #{tpu_custom_call.1} parent=5 // pred_region
      %s127 = ssub.s32 %s10, 1
      // Predicated region
      $region13: #{tpu_custom_call.1} parent=11 // pred_check
        %p128 = pneg %p71
      $region14: #{tpu_custom_call.1} parent=11 // pred_check_branch
        %130 = sbr.rel (%p128) target = $region16
      $region15: #{tpu_custom_call.1} parent=11 // pred_region
        _
      $region16: #{tpu_custom_call.1} parent=11 // pred_fallthru
        _
    $region12: #{tpu_custom_call.1} parent=5 // pred_fallthru
      _
    %p131 = scmp.lt.s32.totalorder %s10, 2
    // Predicated region
    $region17: #{tpu_custom_call.1} parent=5 // pred_check
      %p132 = pneg %p131
    $region18: #{tpu_custom_call.1} parent=5 // pred_check_branch
      %134 = sbr.rel (%p132) target = $region20
    $region19: #{tpu_custom_call.1} parent=5 // pred_region
      // Predicated region
      $region21: #{tpu_custom_call.1} parent=19 // pred_check
        %p135 = pneg %p44
      $region22: #{tpu_custom_call.1} parent=19 // pred_check_branch
        %137 = sbr.rel (%p135) target = $region24
      $region23: #{tpu_custom_call.1} parent=19 // pred_region
        %s138 = smul.u32 2, %s18
        %p139 = scmp.lt.s32.totalorder %s17, 1
        %s140 = scalar_select %p139, %s17, 1
        %p141 = scmp.lt.s32.totalorder %s138, 1
        %s142 = scalar_select %p141, %s138, 1
        %s143 = smul.addr %s140, 2
        %s144 = sadd.s32 %s142, %s143
        %s145 = smul.addr %s144, 2
        %s146 = scalar_lea.vmem %s0, %s145
        %s147 = smul.u32 2, %s18
      $region24: #{tpu_custom_call.1} parent=19 // pred_fallthru
        _
    $region20: #{tpu_custom_call.1} parent=5 // pred_fallthru
      _
    %p148 = scmp.le.s32.totalorder 1, %s10
    %p149 = scmp.lt.s32.totalorder %s10, 3
    %p150 = pnand %p148, %p149
    %p151 = pneg %p150
    // Predicated region
    $region25: #{tpu_custom_call.1} parent=5 // pred_check
      _
    $region26: #{tpu_custom_call.1} parent=5 // pred_check_branch
      %153 = sbr.rel (%p150) target = $region28
    $region27: #{tpu_custom_call.1} parent=5 // pred_region
      %s154 = ssub.s32 %s10, 1
      %s155 = smul.u32 2, %s20
      %p156 = scmp.lt.s32.totalorder %s19, 1
      %s157 = scalar_select %p156, %s19, 1
      %p158 = scmp.lt.s32.totalorder %s155, 1
      %s159 = scalar_select %p158, %s155, 1
      %s160 = smul.addr %s157, 2
      %s161 = sadd.s32 %s159, %s160
      %s162 = smul.addr %s161, 2
      %s163 = scalar_lea.vmem %s0, %s162
      %p164 = pneg %p50
      %p165 = pneg %p47
      %p166 = pneg %p71
      %p167 = pneg %p68
      %p168 = pneg %p92
      %p169 = pneg %p89
      %p170 = pneg %p113
      %p171 = pneg %p110
      %s172 = smul.u32 2, %s20
      %p173 = scmp.lt.s32.totalorder %s19, 1
      %s174 = scalar_select %p173, %s19, 1
      %p175 = scmp.lt.s32.totalorder %s172, 1
      %s176 = scalar_select %p175, %s172, 1
      %s177 = smul.addr %s174, 2
      %s178 = sadd.s32 %s176, %s177
      %s179 = smul.addr %s178, 2
      %s180 = scalar_lea.vmem %s0, %s179
      %s181 = smul.u32 2, %s20
      %p182 = scmp.eq.s32.totalorder %s19, 0
      %p183 = scmp.eq.s32.totalorder %s20, 0
      %p184 = pnand %p182, %p183
      %p185 = pneg %p184
      // Predicated region
      $region29: #{tpu_custom_call.1} parent=27 // pred_check
        _
      $region30: #{tpu_custom_call.1} parent=27 // pred_check_branch
        %187 = sbr.rel (%p184) target = $region32
      $region31: #{tpu_custom_call.1} parent=27 // pred_region
        %vm188 = vcmask 7168
        %189 = vst.msk [vmem:[%s2] sm:$0xff] %vm188, 0.0
        %190 = vst.msk [vmem:[%s2 + $0x8] sm:$0xff] %vm188, 0.0
        %191 = vst.msk [vmem:[%s2 + $0x10] sm:$0xff] %vm188, 0.0
        %192 = vst.msk [vmem:[%s2 + $0x18] sm:$0xff] %vm188, 0.0
        %193 = vst.msk [vmem:[%s3] sm:$0xff] %vm188, 0.0
        %194 = vst.msk [vmem:[%s3 + $0x8] sm:$0xff] %vm188, 0.0
        %195 = vst.msk [vmem:[%s3 + $0x10] sm:$0xff] %vm188, 0.0
        %196 = vst.msk [vmem:[%s3 + $0x18] sm:$0xff] %vm188, 0.0
      $region32: #{tpu_custom_call.1} parent=27 // pred_fallthru
        _
      %v197 = vld [vmem:[%s1] sm:$0xf]
      %v198 = vld [vmem:[%s1 + $0x4] sm:$0xf]
      %v199 = vld [vmem:[%s1 + $0x8] sm:$0xf]
      %v200 = vld [vmem:[%s1 + $0xc] sm:$0xf]
      %v201 = vld [vmem:[%s180] sm:$0xf]
      %v202 = vunpack.c.l.bf16 %v197
      %v203 = vunpack.c.l.bf16 %v198
      %v204 = vunpack.c.l.bf16 %v199
      %v205 = vunpack.c.l.bf16 %v200
      %v206 = vunpack.c.l.bf16 %v201
      %208 = vset.pattern.permute.xlu0 0
      %209 = vperm.xlu0 %208, %v202
      %v210 = vpop.permute.xlu0 %209
      %213 = vset.pattern.permute.xlu0 0
      %214 = vperm.xlu0 %213, %v203
      %v215 = vpop.permute.xlu0 %214
      %218 = vset.pattern.permute.xlu0 0
      %219 = vperm.xlu0 %218, %v204
      %v220 = vpop.permute.xlu0 %219
      %223 = vset.pattern.permute.xlu0 0
      %224 = vperm.xlu0 %223, %v205
      %v225 = vpop.permute.xlu0 %224
      %v228 = vlaneseq
      %v229 = vshrl.u32 %v228, 7
      %v230 = vsub.s32 0, %v229
      %v231 = vrot.slane %v206, %v230
      %v232 = vlaneseq
      %v233 = vshrl.u32 %v232, 7
      %v234 = vsub.s32 4, %v233
      %v235 = vrot.slane %v206, %v234
      %v238 = vlaneseq
      %v239 = vshrl.u32 %v238, 7
      %v240 = vsub.s32 0, %v239
      %v241 = vrot.slane %v231, %v240
      %v242 = vlaneseq
      %v243 = vshrl.u32 %v242, 7
      %v244 = vsub.s32 0, %v243
      %v245 = vrot.slane %v235, %v244
      %v246 = vmul.f32 %v210, %v241
      %v247 = vmul.f32 %v210, %v245
      %v248 = vmul.f32 %v215, %v241
      %v249 = vmul.f32 %v215, %v245
      %v250 = vmul.f32 %v220, %v241
      %v251 = vmul.f32 %v220, %v245
      %v252 = vmul.f32 %v225, %v241
      %v253 = vmul.f32 %v225, %v245
      %254 = vset.pattern.permute.xlu0 1
      %255 = vperm.xlu0 %254, %v202
      %v256 = vpop.permute.xlu0 %255
      %258 = vset.pattern.permute.xlu0 1
      %259 = vperm.xlu0 %258, %v203
      %v260 = vpop.permute.xlu0 %259
      %262 = vset.pattern.permute.xlu0 1
      %263 = vperm.xlu0 %262, %v204
      %v264 = vpop.permute.xlu0 %263
      %266 = vset.pattern.permute.xlu0 1
      %267 = vperm.xlu0 %266, %v205
      %v268 = vpop.permute.xlu0 %267
      %v270 = vlaneseq
      %v271 = vshrl.u32 %v270, 7
      %v272 = vsub.s32 1, %v271
      %v273 = vrot.slane %v206, %v272
      %v274 = vlaneseq
      %v275 = vshrl.u32 %v274, 7
      %v276 = vsub.s32 5, %v275
      %v277 = vrot.slane %v206, %v276
      %v280 = vlaneseq
      %v281 = vshrl.u32 %v280, 7
      %v282 = vsub.s32 1, %v281
      %v283 = vrot.slane %v273, %v282
      %v284 = vlaneseq
      %v285 = vshrl.u32 %v284, 7
      %v286 = vsub.s32 1, %v285
      %v287 = vrot.slane %v277, %v286
      %v288 = vmul.f32 %v256, %v283
      %v289 = vmul.f32 %v256, %v287
      %v290 = vmul.f32 %v260, %v283
      %v291 = vmul.f32 %v260, %v287
      %v292 = vmul.f32 %v264, %v283
      %v293 = vmul.f32 %v264, %v287
      %v294 = vmul.f32 %v268, %v283
      %v295 = vmul.f32 %v268, %v287
      %v296 = vadd.f32 %v246, %v288
      %v297 = vadd.f32 %v247, %v289
      %v298 = vadd.f32 %v248, %v290
      %v299 = vadd.f32 %v249, %v291
      %v300 = vadd.f32 %v250, %v292
      %v301 = vadd.f32 %v251, %v293
      %v302 = vadd.f32 %v252, %v294
      %v303 = vadd.f32 %v253, %v295
      %304 = vset.pattern.permute.xlu0 2
      %305 = vperm.xlu0 %304, %v202
      %v306 = vpop.permute.xlu0 %305
      %308 = vset.pattern.permute.xlu0 2
      %309 = vperm.xlu0 %308, %v203
      %v310 = vpop.permute.xlu0 %309
      %312 = vset.pattern.permute.xlu0 2
      %313 = vperm.xlu0 %312, %v204
      %v314 = vpop.permute.xlu0 %313
      %316 = vset.pattern.permute.xlu0 2
      %317 = vperm.xlu0 %316, %v205
      %v318 = vpop.permute.xlu0 %317
      %v320 = vlaneseq
      %v321 = vshrl.u32 %v320, 7
      %v322 = vsub.s32 2, %v321
      %v323 = vrot.slane %v206, %v322
      %v324 = vlaneseq
      %v325 = vshrl.u32 %v324, 7
      %v326 = vsub.s32 6, %v325
      %v327 = vrot.slane %v206, %v326
      %v330 = vlaneseq
      %v331 = vshrl.u32 %v330, 7
      %v332 = vsub.s32 2, %v331
      %v333 = vrot.slane %v323, %v332
      %v334 = vlaneseq
      %v335 = vshrl.u32 %v334, 7
      %v336 = vsub.s32 2, %v335
      %v337 = vrot.slane %v327, %v336
      %v338 = vmul.f32 %v306, %v333
      %v339 = vmul.f32 %v306, %v337
      %v340 = vmul.f32 %v310, %v333
      %v341 = vmul.f32 %v310, %v337
      %v342 = vmul.f32 %v314, %v333
      %v343 = vmul.f32 %v314, %v337
      %v344 = vmul.f32 %v318, %v333
      %v345 = vmul.f32 %v318, %v337
      %v346 = vadd.f32 %v296, %v338
      %v347 = vadd.f32 %v297, %v339
      %v348 = vadd.f32 %v298, %v340
      %v349 = vadd.f32 %v299, %v341
      %v350 = vadd.f32 %v300, %v342
      %v351 = vadd.f32 %v301, %v343
      %v352 = vadd.f32 %v302, %v344
      %v353 = vadd.f32 %v303, %v345
      %354 = vset.pattern.permute.xlu0 3
      %355 = vperm.xlu0 %354, %v202
      %v356 = vpop.permute.xlu0 %355
      %358 = vset.pattern.permute.xlu0 3
      %359 = vperm.xlu0 %358, %v203
      %v360 = vpop.permute.xlu0 %359
      %362 = vset.pattern.permute.xlu0 3
      %363 = vperm.xlu0 %362, %v204
      %v364 = vpop.permute.xlu0 %363
      %366 = vset.pattern.permute.xlu0 3
      %367 = vperm.xlu0 %366, %v205
      %v368 = vpop.permute.xlu0 %367
      %v370 = vlaneseq
      %v371 = vshrl.u32 %v370, 7
      %v372 = vsub.s32 3, %v371
      %v373 = vrot.slane %v206, %v372
      %v374 = vlaneseq
      %v375 = vshrl.u32 %v374, 7
      %v376 = vsub.s32 7, %v375
      %v377 = vrot.slane %v206, %v376
      %v380 = vlaneseq
      %v381 = vshrl.u32 %v380, 7
      %v382 = vsub.s32 3, %v381
      %v383 = vrot.slane %v373, %v382
      %v384 = vlaneseq
      %v385 = vshrl.u32 %v384, 7
      %v386 = vsub.s32 3, %v385
      %v387 = vrot.slane %v377, %v386
      %v388 = vmul.f32 %v356, %v383
      %v389 = vmul.f32 %v356, %v387
      %v390 = vmul.f32 %v360, %v383
      %v391 = vmul.f32 %v360, %v387
      %v392 = vmul.f32 %v364, %v383
      %v393 = vmul.f32 %v364, %v387
      %v394 = vmul.f32 %v368, %v383
      %v395 = vmul.f32 %v368, %v387
      %v396 = vadd.f32 %v346, %v388
      %v397 = vadd.f32 %v347, %v389
      %v398 = vadd.f32 %v348, %v390
      %v399 = vadd.f32 %v349, %v391
      %v400 = vadd.f32 %v350, %v392
      %v401 = vadd.f32 %v351, %v393
      %v402 = vadd.f32 %v352, %v394
      %v403 = vadd.f32 %v353, %v395
      %v404 = vld [vmem:[%s2] sm:$0xff]
      %v405 = vld [vmem:[%s2 + $0x8] sm:$0xff]
      %v406 = vld [vmem:[%s2 + $0x10] sm:$0xff]
      %v407 = vld [vmem:[%s2 + $0x18] sm:$0xff]
      %v408 = vadd.f32 %v396, %v397
      %409 = vadd.xlane.f32.xlu0 %v408
      %v410 = vpop.xlane.xlu0 %409
      %v411 = vadd.f32 %v398, %v399
      %412 = vadd.xlane.f32.xlu0 %v411
      %v413 = vpop.xlane.xlu0 %412
      %v414 = vadd.f32 %v400, %v401
      %415 = vadd.xlane.f32.xlu0 %v414
      %v416 = vpop.xlane.xlu0 %415
      %v417 = vadd.f32 %v402, %v403
      %418 = vadd.xlane.f32.xlu0 %v417
      %v419 = vpop.xlane.xlu0 %418
      %v420 = vadd.f32 %v404, %v410
      %v421 = vadd.f32 %v405, %v413
      %v422 = vadd.f32 %v406, %v416
      %v423 = vadd.f32 %v407, %v419
      %vm424 = vcmask 7168
      %425 = vst.msk [vmem:[%s2] sm:$0xff] %vm424, %v420
      %426 = vst.msk [vmem:[%s2 + $0x8] sm:$0xff] %vm424, %v421
      %427 = vst.msk [vmem:[%s2 + $0x10] sm:$0xff] %vm424, %v422
      %428 = vst.msk [vmem:[%s2 + $0x18] sm:$0xff] %vm424, %v423
      %v429 = vld [vmem:[%s3] sm:$0xff]
      %v430 = vld [vmem:[%s3 + $0x8] sm:$0xff]
      %v431 = vld [vmem:[%s3 + $0x10] sm:$0xff]
      %v432 = vld [vmem:[%s3 + $0x18] sm:$0xff]
      %v433 = vmul.f32 %v396, %v396
      %v434 = vmul.f32 %v397, %v397
      %v435 = vmul.f32 %v398, %v398
      %v436 = vmul.f32 %v399, %v399
      %v437 = vmul.f32 %v400, %v400
      %v438 = vmul.f32 %v401, %v401
      %v439 = vmul.f32 %v402, %v402
      %v440 = vmul.f32 %v403, %v403
      %v441 = vadd.f32 %v433, %v434
      %442 = vadd.xlane.f32.xlu0 %v441
      %v443 = vpop.xlane.xlu0 %442
      %v444 = vadd.f32 %v435, %v436
      %445 = vadd.xlane.f32.xlu0 %v444
      %v446 = vpop.xlane.xlu0 %445
      %v447 = vadd.f32 %v437, %v438
      %448 = vadd.xlane.f32.xlu0 %v447
      %v449 = vpop.xlane.xlu0 %448
      %v450 = vadd.f32 %v439, %v440
      %451 = vadd.xlane.f32.xlu0 %v450
      %v452 = vpop.xlane.xlu0 %451
      %v453 = vadd.f32 %v429, %v443
      %v454 = vadd.f32 %v430, %v446
      %v455 = vadd.f32 %v431, %v449
      %v456 = vadd.f32 %v432, %v452
      %457 = vst.msk [vmem:[%s3] sm:$0xff] %vm424, %v453
      %458 = vst.msk [vmem:[%s3 + $0x8] sm:$0xff] %vm424, %v454
      %459 = vst.msk [vmem:[%s3 + $0x10] sm:$0xff] %vm424, %v455
      %460 = vst.msk [vmem:[%s3 + $0x18] sm:$0xff] %vm424, %v456
      // Predicated region
      $region33: #{tpu_custom_call.1} parent=27 // pred_check
        %p461 = pneg %p89
      $region34: #{tpu_custom_call.1} parent=27 // pred_check_branch
        %463 = sbr.rel (%p461) target = $region36
      $region35: #{tpu_custom_call.1} parent=27 // pred_region
        _
      $region36: #{tpu_custom_call.1} parent=27 // pred_fallthru
        _
      // Predicated region
      $region37: #{tpu_custom_call.1} parent=27 // pred_check
        %p464 = pneg %p110
      $region38: #{tpu_custom_call.1} parent=27 // pred_check_branch
        %466 = sbr.rel (%p464) target = $region40
      $region39: #{tpu_custom_call.1} parent=27 // pred_region
        _
      $region40: #{tpu_custom_call.1} parent=27 // pred_fallthru
        _
      // Predicated region
      $region41: #{tpu_custom_call.1} parent=27 // pred_check
        %p467 = pneg %p89
      $region42: #{tpu_custom_call.1} parent=27 // pred_check_branch
        %469 = sbr.rel (%p467) target = $region44
      $region43: #{tpu_custom_call.1} parent=27 // pred_region
        _
      $region44: #{tpu_custom_call.1} parent=27 // pred_fallthru
        _
      // Predicated region
      $region45: #{tpu_custom_call.1} parent=27 // pred_check
        %p470 = pneg %p110
      $region46: #{tpu_custom_call.1} parent=27 // pred_check_branch
        %472 = sbr.rel (%p470) target = $region48
      $region47: #{tpu_custom_call.1} parent=27 // pred_region
        _
      $region48: #{tpu_custom_call.1} parent=27 // pred_fallthru
        _
    $region28: #{tpu_custom_call.1} parent=5 // pred_fallthru
      _
    %p473 = scmp.le.s32.totalorder 2, %s10
    // Predicated region
    $region49: #{tpu_custom_call.1} parent=5 // pred_check
      %p474 = pneg %p473
    $region50: #{tpu_custom_call.1} parent=5 // pred_check_branch
      %476 = sbr.rel (%p474) target = $region52
    $region51: #{tpu_custom_call.1} parent=5 // pred_region
      %s477 = ssub.s32 %s10, 2
    $region52: #{tpu_custom_call.1} parent=5 // pred_fallthru
      _
  $region6: #{tpu_custom_call.1} parent=0 // loop_footer
    %s14 = sadd.s32 1, %s10
  $region7: #{tpu_custom_call.1} parent=0 // loop_footer_branch
    %9 = sbr.rel target = $region3
  $region8: #{tpu_custom_call.1} parent=0 // loop_exit
    _

</llo_original>
